<compile_context>
chip_gen: v7x
topology: tpu7x:2x2x1
jax: 0.10.0
libtpu: 0.0.40
codegen_flags: <defaults>
</compile_context>

<pallas_src>
import functools

import jax
import jax.numpy as jnp
from jax.experimental import pallas as pl
from jax.experimental.pallas import tpu as pltpu


def _round_up(x, m):
    return ((x + m - 1) // m) * m


def _default_vmem_limit_bytes():
    # ~75% of physical VMEM, capped at 100 MiB: ~48 MiB on v7x, ~96 MiB v5e/v6e.
    try:
        cap = int(getattr(pltpu.get_tpu_info(), "vmem_capacity_bytes"))
    except Exception:
        cap = 64 * 1024 * 1024
    return min((cap * 3) // 4, 100 * 1024 * 1024)


def _plan_tiles(n_pad, tile_dst, tile_src):
    """Pick tile sizes that exactly divide the padded node axis."""
    def pick(target, align):
        t = min(target, n_pad)
        t = max(align, (t // align) * align)
        while n_pad % t:
            t -= align
        return t
    # Keep >= 2 dst tiles when possible so the "parallel" dst axis can still
    # split across v7x's two TensorCores.
    td_target = min(tile_dst, max(128, n_pad // 2)) if n_pad >= 256 else tile_dst
    td = pick(td_target, 8)
    ts = pick(tile_src, 128)
    return td, ts


# ----------------------------------------------------------------------------
# Kernel 1 (hoisted): HW[b] = H @ basis_b, computed once per layer.
#   grid = (bases, node tiles); each step is one (ts, din_p) @ (din_p, dout_p).
# ----------------------------------------------------------------------------
def _hw_kernel(h_ref, w_ref, o_ref):
    o_ref[0] = jnp.dot(h_ref[...], w_ref[0],
                       preferred_element_type=jnp.float32).astype(o_ref.dtype)


def _precompute_hw(h_bf16, basis_w, ts, vmem_limit):
    n_pad, din_p = h_bf16.shape
    nb, _, dout_p = basis_w.shape
    return pl.pallas_call(
        _hw_kernel,
        out_shape=jax.ShapeDtypeStruct((nb, n_pad, dout_p), jnp.bfloat16),
        grid_spec=pltpu.PrefetchScalarGridSpec(
            num_scalar_prefetch=0,
            grid=(nb, n_pad // ts),
            in_specs=[
                pl.BlockSpec((ts, din_p), lambda b, k: (k, 0)),        # H tile
                pl.BlockSpec((1, din_p, dout_p), lambda b, k: (b, 0, 0)),  # basis_b
            ],
            out_specs=pl.BlockSpec((1, ts, dout_p), lambda b, k: (b, k, 0)),
        ),
        compiler_params=pltpu.CompilerParams(
            dimension_semantics=("parallel", "parallel"),
            vmem_limit_bytes=vmem_limit,
        ),
    )(h_bf16, basis_w)


# ----------------------------------------------------------------------------
# Kernel 2 (main): O[i] = act( sum_b sum_k A_tilde[b,i,k] @ HW[b,k]
#                              [+ H[i] @ Wself] + bias )
# grid = (dst tiles [parallel], bases [arbitrary], src tiles [arbitrary]).
# Accumulation is done in a per-dst-tile f32 VMEM scratch; output written once
# in the epilogue (bf16 for hidden layers).
# ----------------------------------------------------------------------------
def _rgcn_agg_kernel(*refs, use_self_loop, apply_relu):
    if use_self_loop:
        a_ref, hw_ref, bias_ref, hself_ref, wself_ref, o_ref, acc_ref = refs
    else:
        a_ref, hw_ref, bias_ref, o_ref, acc_ref = refs
        hself_ref = wself_ref = None

    bi = pl.program_id(1)   # basis index
    ki = pl.program_id(2)   # src-node tile index
    first = jnp.logical_and(bi == 0, ki == 0)
    last = jnp.logical_and(bi == pl.num_programs(1) - 1,
                           ki == pl.num_programs(2) - 1)

    # Single bf16 MXU matmul per step, f32 accumulation in VMEM scratch.
    partial = jnp.dot(a_ref[0], hw_ref[0], preferred_element_type=jnp.float32)

    @pl.when(first)
    def _():
        acc_ref[...] = partial          # direct store: no zero-init pass

    @pl.when(jnp.logical_not(first))
    def _():
        acc_ref[...] += partial

    @pl.when(last)
    def _():
        out = acc_ref[...] + bias_ref[...]
        if use_self_loop:
            out = out + jnp.dot(hself_ref[...], wself_ref[...],
                                preferred_element_type=jnp.float32)
        if apply_relu:
            out = jnp.maximum(out, 0.0)
        o_ref[...] = out.astype(o_ref.dtype)


def rgcn_layer(a_tilde, h_pad, basis_w, bias, w_self=None, *, apply_relu=True,
               out_dtype=jnp.bfloat16, tile_dst=1024, tile_src=1024,
               vmem_limit_bytes=None):
    """One RelGraphConv layer (basis form).

    a_tilde : [B, Np, Np]        bf16, A_tilde[b] = sum_r coeff[r,b] * A_r (padded)
    h_pad   : [Np, Din_p]        bf16 node features (node & lane padded)
    basis_w : [B, Din_p, Dout_p] bf16 zero-padded basis weights
    bias    : [1, Dout_p]        f32
    w_self  : [Din_p, Dout_p]    bf16 or None (self-loop weight)
    returns : [Np, Dout_p]       out_dtype
    """
    B, n_pad, _ = a_tilde.shape
    din_p, dout_p = basis_w.shape[1], basis_w.shape[2]
    assert h_pad.shape == (n_pad, din_p)
    use_self_loop = w_self is not None
    vmem_limit = (_default_vmem_limit_bytes() if vmem_limit_bytes is None
                  else vmem_limit_bytes)
    td, ts = _plan_tiles(n_pad, tile_dst, tile_src)

    # Hoisted: HW[b] = H @ basis_b, computed once (not once per dst tile).
    hw = _precompute_hw(h_pad, basis_w, ts, vmem_limit)

    kernel = functools.partial(_rgcn_agg_kernel,
                               use_self_loop=use_self_loop,
                               apply_relu=apply_relu)

    in_specs = [
        pl.BlockSpec((1, td, ts), lambda i, b, k: (b, i, k)),          # A_tilde
        pl.BlockSpec((1, ts, dout_p), lambda i, b, k: (b, k, 0)),      # HW
        pl.BlockSpec((1, dout_p), lambda i, b, k: (0, 0)),             # bias
    ]
    args = [a_tilde, hw, bias]
    if use_self_loop:
        in_specs += [
            pl.BlockSpec((td, din_p), lambda i, b, k: (i, 0)),         # H (dst)
            pl.BlockSpec((din_p, dout_p), lambda i, b, k: (0, 0)),     # W_self
        ]
        args += [h_pad, w_self]

    return pl.pallas_call(
        kernel,
        out_shape=jax.ShapeDtypeStruct((n_pad, dout_p), out_dtype),
        grid_spec=pltpu.PrefetchScalarGridSpec(
            num_scalar_prefetch=0,
            grid=(n_pad // td, B, n_pad // ts),
            in_specs=in_specs,
            out_specs=pl.BlockSpec((td, dout_p), lambda i, b, k: (i, 0)),
            scratch_shapes=[pltpu.VMEM((td, dout_p), jnp.float32)],
        ),
        compiler_params=pltpu.CompilerParams(
            # dst tiles split across TensorCores (v7x); basis/src are the
            # sequential reduction -> must stay "arbitrary".
            dimension_semantics=("parallel", "arbitrary", "arbitrary"),
            vmem_limit_bytes=vmem_limit,
        ),
    )(*args)


# ----------------------------------------------------------------------------
# BaseRGCN-equivalent model (hidden layers h_dim->h_dim + ReLU, output layer
# h_dim->out_dim linear), basis-decomposed parameters built deterministically.
# ----------------------------------------------------------------------------
class BaseRGCNPallas:
    def __init__(self, adj, out_dim, num_rels, h_dim=16, num_bases=-1,
                 num_hidden_layers=0, use_self_loop=False, key=None,
                 tile_dst=1024, tile_src=1024):
        # TODO(synk): dropout is a no-op here (eval mode / dropout=0 default).
        self.adj = adj                      # [R, N, N] f32 normalized adjacency
        self.num_nodes = adj.shape[1]
        self.num_rels = num_rels
        self.h_dim = h_dim
        self.out_dim = out_dim
        self.num_bases = num_rels if num_bases < 0 else num_bases
        self.use_self_loop = use_self_loop
        self.tile_dst = tile_dst
        self.tile_src = tile_src

        if key is None:
            key = jax.random.PRNGKey(0)

        # Zero-pad the node axis once so tiles always divide it exactly.
        td, ts = _plan_tiles(_round_up(self.num_nodes, 128), tile_dst, tile_src)
        self.n_pad = _round_up(self.num_nodes, max(td, ts, 128))
        adj_pad = jnp.zeros((num_rels, self.n_pad, self.n_pad), jnp.float32)
        self.adj_pad = adj_pad.at[:, :self.num_nodes, :self.num_nodes].set(adj)

        self.layers = []      # kernel-ready (padded, bf16) params
        self.layers_ref = []  # raw f32 params for the pure-JAX reference
        dims = ([(h_dim, h_dim, True)] * num_hidden_layers
                + [(h_dim, out_dim, False)])
        for din, dout, relu in dims:
            key, raw = self._make_layer(key, din, dout)
            self.layers_ref.append((raw, relu))
            self.layers.append((self._prep_layer(raw, din, dout), relu))

    def _make_layer(self, key, din, dout):
        k1, k2, k3, key = jax.random.split(key, 4)
        basis = jax.random.normal(k1, (self.num_bases, din, dout),
                                  jnp.float32) * (1.0 / jnp.sqrt(din))
        coeff = jax.random.normal(k2, (self.num_rels, self.num_bases),
                                  jnp.float32) * (1.0 / jnp.sqrt(self.num_bases))
        w_self = jax.random.normal(k3, (din, dout), jnp.float32) * (
            1.0 / jnp.sqrt(din))
        bias = jnp.zeros((1, dout), jnp.float32)
        return key, (coeff, basis, w_self, bias)

    def _prep_layer(self, raw, din, dout):
        coeff, basis, w_self, bias = raw
        din_p, dout_p = _round_up(din, 128), _round_up(dout, 128)
        # Fold the basis decomposition into the adjacency (done once, host/XLA).
        a_tilde = jnp.einsum('rb,rnm->bnm', coeff,
                             self.adj_pad).astype(jnp.bfloat16)
        basis_p = jnp.zeros((self.num_bases, din_p, dout_p), jnp.bfloat16)
        basis_p = basis_p.at[:, :din, :dout].set(basis.astype(jnp.bfloat16))
        bias_p = jnp.zeros((1, dout_p), jnp.float32).at[:, :dout].set(bias)
        if self.use_self_loop:
            wself_p = jnp.zeros((din_p, dout_p), jnp.bfloat16)
            wself_p = wself_p.at[:din, :dout].set(w_self.astype(jnp.bfloat16))
        else:
            wself_p = None
        return a_tilde, basis_p, bias_p, wself_p

    def forward(self, h):
        n, din = h.shape
        din_p0 = _round_up(self.h_dim, 128)
        h_pad = jnp.zeros((self.n_pad, din_p0), jnp.bfloat16)
        h_pad = h_pad.at[:n, :din].set(h.astype(jnp.bfloat16))
        n_layers = len(self.layers)
        for idx, ((a_tilde, basis_p, bias_p, wself_p), relu) in enumerate(
                self.layers):
            is_last = idx == n_layers - 1
            h_pad = rgcn_layer(
                a_tilde, h_pad, basis_p, bias_p, w_self=wself_p,
                apply_relu=relu,
                out_dtype=jnp.float32 if is_last else jnp.bfloat16,
                tile_dst=self.tile_dst, tile_src=self.tile_src)
        return h_pad[:n, :self.out_dim].astype(jnp.float32)

    # pure-JAX f32 reference (original per-relation formulation)
    def forward_ref(self, h):
        for (coeff, basis, w_self, bias), relu in self.layers_ref:
            w_rel = jnp.einsum('rb,bio->rio', coeff, basis)
            msg = jnp.einsum('rnm,md->rnd', self.adj, h)
            out = jnp.einsum('rnd,rde->ne', msg, w_rel) + bias
            if self.use_self_loop:
                out = out + h @ w_self
            if relu:
                out = jnp.maximum(out, 0.0)
            h = out
        return h


def build_random_graph(key, num_nodes, num_edges, num_rels):
    """Random multigraph -> per-relation dense normalized adjacency [R, N, N].

    norm_e = 1 / in_degree(dst)  (DGL's usual 'norm' edge feature).
    """
    k1, k2, k3 = jax.random.split(key, 3)
    src = jax.random.randint(k1, (num_edges,), 0, num_nodes)
    dst = jax.random.randint(k2, (num_edges,), 0, num_nodes)
    etype = jax.random.randint(k3, (num_edges,), 0, num_rels)

    in_deg = jnp.zeros((num_nodes,), jnp.float32).at[dst].add(1.0)
    norm = 1.0 / jnp.maximum(in_deg[dst], 1.0)

    adj = jnp.zeros((num_rels, num_nodes, num_nodes), jnp.float32)
    adj = adj.at[etype, dst, src].add(norm)
    return adj


if __name__ == "__main__":
    key = jax.random.PRNGKey(0)
    kg, kh = jax.random.split(key)

    num_nodes = 64
    num_edges = 256
    num_rels = 4
    h_dim = 32
    out_dim = 16
    num_bases = 2
    num_hidden_layers = 1

    adj = build_random_graph(kg, num_nodes, num_edges, num_rels)
    h0 = jax.random.normal(kh, (num_nodes, h_dim), jnp.float32)

    for use_self_loop in (False, True):
        model = BaseRGCNPallas(adj, out_dim=out_dim, num_rels=num_rels,
                               h_dim=h_dim, num_bases=num_bases,
                               num_hidden_layers=num_hidden_layers,
                               use_self_loop=use_self_loop,
                               key=jax.random.PRNGKey(0))
        out = jax.block_until_ready(model.forward(h0))
        ref = model.forward_ref(h0)
        assert out.shape == (num_nodes, out_dim)
        # bf16 matmul path -> compare against f32 reference with a loose bound.
        err = float(jnp.max(jnp.abs(out - ref)))
        scale = float(jnp.max(jnp.abs(ref))) + 1e-6
        assert err / scale < 5e-2, (
            f"mismatch vs reference (self_loop={use_self_loop}, "
            f"rel err {err / scale:.3e})")

    print("KERNEL_OK")
</pallas_src>

<mosaic_0001>
module attributes {stable_mosaic.version = 11 : i64} {
  func.func @_hw_kernel(%arg0: i32, %arg1: i32, %arg2: memref<128x128xbf16, #tpu.memory_space<vmem>>, %arg3: memref<1x128x128xbf16, #tpu.memory_space<vmem>>, %arg4: memref<1x128x128xbf16, #tpu.memory_space<vmem>>) attributes {dimension_semantics = [#tpu.dimension_semantics<parallel>, #tpu.dimension_semantics<parallel>], iteration_bounds = array<i64: 2, 1>, scalar_prefetch = 0 : i64, scratch_operands = 0 : i64, tpu.core_type = #tpu.core_type<tc>, window_params = [{transform_indices = @transform_0, window_bounds = array<i64: 128, 128>}, {transform_indices = @transform_1, window_bounds = array<i64: 1, 128, 128>}, {transform_indices = @transform_2, window_bounds = array<i64: 1, 128, 128>}]} {
    %c0 = arith.constant 0 : index
    %c0_0 = arith.constant 0 : index
    %0 = vector.load %arg2[%c0, %c0_0] : memref<128x128xbf16, #tpu.memory_space<vmem>>, vector<128x128xbf16>
    %c0_1 = arith.constant 0 : index
    %c0_2 = arith.constant 0 : index
    %c0_3 = arith.constant 0 : index
    %1 = vector.load %arg3[%c0_1, %c0_2, %c0_3] : memref<1x128x128xbf16, #tpu.memory_space<vmem>>, vector<1x128x128xbf16>
    %2 = vector.shape_cast %1 : vector<1x128x128xbf16> to vector<128x128xbf16>
    %cst = arith.constant dense<0.000000e+00> : vector<128x128xf32>
    %3 = tpu.matmul %0, %2, %cst {dimension_numbers = #tpu.dot_dimension_numbers<[1], [0], [0], [1], [0, 0, 1, 1], [], []>} : vector<128x128xbf16>, vector<128x128xbf16>, vector<128x128xf32> -> vector<128x128xf32>
    %4 = arith.truncf %3 : vector<128x128xf32> to vector<128x128xbf16>
    %c0_4 = arith.constant 0 : index
    %c0_5 = arith.constant 0 : index
    %c0_6 = arith.constant 0 : index
    %5 = vector.load %arg4[%c0_4, %c0_5, %c0_6] : memref<1x128x128xbf16, #tpu.memory_space<vmem>>, vector<1x128x128xbf16>
    %6 = vector.shape_cast %5 : vector<1x128x128xbf16> to vector<128x128xbf16>
    %7 = vector.shape_cast %4 : vector<128x128xbf16> to vector<1x128x128xbf16>
    tpu.vector_store %arg4[%c0_4, %c0_5, %c0_6], %7 {strides = array<i32>} : memref<1x128x128xbf16, #tpu.memory_space<vmem>>, vector<1x128x128xbf16>,
    return
  }
  func.func @transform_0(%arg0: i32, %arg1: i32) -> (i32, i32) {
    %c0_i32 = arith.constant 0 : i32
    %c0_i32_0 = arith.constant 0 : i32
    return %arg1, %c0_i32 : i32, i32
  }
  func.func @transform_1(%arg0: i32, %arg1: i32) -> (i32, i32, i32) {
    %c0_i32 = arith.constant 0 : i32
    %c0_i32_0 = arith.constant 0 : i32
    %c0_i32_1 = arith.constant 0 : i32
    return %arg0, %c0_i32, %c0_i32_0 : i32, i32, i32
  }
  func.func @transform_2(%arg0: i32, %arg1: i32) -> (i32, i32, i32) {
    %c0_i32 = arith.constant 0 : i32
    %c0_i32_0 = arith.constant 0 : i32
    return %arg0, %arg1, %c0_i32 : i32, i32, i32
  }
}

</mosaic_0001>

<llo_original>
// kernel: tpu_custom_call.1
$region0: #{tpu_custom_call.1}
  #allocation0 [shape = 'u32[]', space=smem, size = 0x4, offset = 0x4, fixed_abs, tag = 'smem constant byte address 0x4 - core index']
  #allocation1 [shape = 'u32[144,128]{1,0:T(1,128)}', space=vmem, size = 0x12000, scoped, tag = 'internal scratch']
  %s0 = inlined_call_operand.hbm [shape: bf16[128,128], index: 0, kind: input, shape index: {}]
  %s1 = inlined_call_operand.hbm [shape: bf16[2,128,128], index: 1, kind: input, shape index: {}]
  %s2 = inlined_call_operand.hbm [shape: bf16[2,128,128], index: 2, kind: output, shape index: {}]
  %s3 = sld [smem:[#allocation0]]
  $region49: #{tpu_custom_call.1} parent=0
    _
  %s5 = ssub.s32 1, %s3
  %s6 = scalar_select 0, %s5, %s3
  $region1: #{tpu_custom_call.1} parent=0
    #allocation2 [shape = 'u8[32768]{0}', space=vmem, size = 0x8000, scoped, tag = 'input window, operand 0, single buffered']
    #allocation3 [shape = 's32[2]{0}', space=sflag, size = 0x8, scoped, tag = 'scoped memory for tpu_custom_call.1']
    #allocation4 [shape = 's32[2]{0}', space=sflag, size = 0x8, scoped, tag = 'scoped memory for tpu_custom_call.1']
    #allocation5 [shape = 'u8[65536]{0}', space=vmem, size = 0x10000, scoped, tag = 'input window, operand 1']
    #allocation6 [shape = 's32[2]{0}', space=sflag, size = 0x8, scoped, tag = 'scoped memory for tpu_custom_call.1']
    #allocation7 [shape = 'u8[65536]{0}', space=vmem, size = 0x10000, scoped, tag = 'output window, operand 0']
    %7 = vsyncpa [#allocation3], 0
    %8 = vsyncpa [#allocation6], 0
    %s9 = scalar_lea.sflag [#allocation6], 1
    %10 = vsyncpa %s9, 0
    %11 = vsyncpa [#allocation4], 0
    %s12 = scalar_lea.sflag [#allocation4], 1
    %13 = vsyncpa %s12, 0
    loop: start=0, step=1, limit=4
    $region2: #{tpu_custom_call.1} parent=1 // loop_pre_header
      _
    $region3: #{tpu_custom_call.1} parent=1 // loop_header
      %s15 = sphi 0, %s19
      %p16 = scmp.ge.s32.totalorder %s15, 4
      %s22 = sphi 0, %s34
      %s23 = sphi 0, %s30
      %s24 = sphi 0, %s22
      %s25 = sphi 0, %s23
      %s26 = sphi 0, %s24
      %s27 = sphi 0, %s25
      %s37 = sphi 0, %s39
      %s40 = sphi 0, %s37
      %s41 = sphi 0, %s40
      %s57 = sphi 0, %s41
      %s63 = sphi 0, %s65
      %s66 = sphi 0, %s63
      %s67 = sphi 0, %s66
      %s83 = sphi 0, %s67
      %s91 = sphi 0, %s93
      %s94 = sphi 0, %s91
      %s95 = sphi 0, %s94
      %s111 = sphi 0, %s95
    $region4: #{tpu_custom_call.1} parent=1 // loop_header_branch
      %18 = sbr.rel (%p16) target = $region8
    $region5: #{tpu_custom_call.1} parent=1 // loop_body
      %s20 = ssub.s32 %s15, 1
      %s21 = ssub.s32 %s15, 2
      %s28 = sadd.s32 1, %s23
      %p29 = scmp.ge.s32.totalorder %s28, 1
      %s30 = scalar_select %p29, 0, %s28
      %s31 = sadd.s32 1, %s22
      %s32 = scalar_select %p29, %s31, %s22
      %p33 = scmp.ge.s32.totalorder %s32, 2
      %s34 = scalar_select %p33, 0, %s32
      %s35 = ssub.s32 %s23, %s30
      %p36 = scmp.eq.s32.totalorder %s35, 0
      %s38 = sadd.s32 %s37, 1
      %s39 = scalar_select %p36, %s37, %s38
      %p42 = pneg %p36
      %p43 = scmp.eq.s32.totalorder %s15, 1
      %p44 = por %p42, %p43
      %p45 = scmp.ne.s32.totalorder %s37, %s40
      %p46 = scmp.eq.s32.totalorder %s15, 0
      %p47 = por %p45, %p46
      %p48 = scmp.ne.s32.totalorder %s37, %s40
      %p49 = scmp.eq.s32.totalorder %s20, 1
      %p50 = por %p48, %p49
      %p51 = scmp.ne.s32.totalorder %s40, %s41
      %p52 = scmp.eq.s32.totalorder %s20, 0
      %p53 = por %p51, %p52
      %p54 = scmp.ne.s32.totalorder %s40, %s41
      %p55 = scmp.eq.s32.totalorder %s21, 1
      %p56 = por %p54, %p55
      %p58 = scmp.ne.s32.totalorder %s41, %s57
      %p59 = scmp.eq.s32.totalorder %s21, 0
      %p60 = por %p58, %p59
      %s61 = ssub.s32 %s22, %s34
      %p62 = scmp.eq.s32.totalorder %s61, 0
      %s64 = sadd.s32 %s63, 1
      %s65 = scalar_select %p62, %s63, %s64
      %p68 = pneg %p62
      %p69 = scmp.eq.s32.totalorder %s15, 1
      %p70 = por %p68, %p69
      %p71 = scmp.ne.s32.totalorder %s63, %s66
      %p72 = scmp.eq.s32.totalorder %s15, 0
      %p73 = por %p71, %p72
      %p74 = scmp.ne.s32.totalorder %s63, %s66
      %p75 = scmp.eq.s32.totalorder %s20, 1
      %p76 = por %p74, %p75
      %p77 = scmp.ne.s32.totalorder %s66, %s67
      %p78 = scmp.eq.s32.totalorder %s20, 0
      %p79 = por %p77, %p78
      %p80 = scmp.ne.s32.totalorder %s66, %s67
      %p81 = scmp.eq.s32.totalorder %s21, 1
      %p82 = por %p80, %p81
      %p84 = scmp.ne.s32.totalorder %s67, %s83
      %p85 = scmp.eq.s32.totalorder %s21, 0
      %p86 = por %p84, %p85
      %s87 = ssub.s32 %s22, %s34
      %s88 = ssub.s32 %s23, %s30
      %s89 = sor.u32 %s87, %s88
      %p90 = scmp.eq.s32.totalorder %s89, 0
      %s92 = sadd.s32 %s91, 1
      %s93 = scalar_select %p90, %s91, %s92
      %p96 = pneg %p90
      %p97 = scmp.eq.s32.totalorder %s15, 1
      %p98 = por %p96, %p97
      %p99 = scmp.ne.s32.totalorder %s91, %s94
      %p100 = scmp.eq.s32.totalorder %s15, 0
      %p101 = por %p99, %p100
      %p102 = scmp.ne.s32.totalorder %s91, %s94
      %p103 = scmp.eq.s32.totalorder %s20, 1
      %p104 = por %p102, %p103
      %p105 = scmp.ne.s32.totalorder %s94, %s95
      %p106 = scmp.eq.s32.totalorder %s20, 0
      %p107 = por %p105, %p106
      %p108 = scmp.ne.s32.totalorder %s94, %s95
      %p109 = scmp.eq.s32.totalorder %s21, 1
      %p110 = por %p108, %p109
      %p112 = scmp.ne.s32.totalorder %s95, %s111
      %p113 = scmp.eq.s32.totalorder %s21, 0
      %p114 = por %p112, %p113
      %p115 = scmp.le.s32.totalorder 1, %s15
      %p116 = scmp.lt.s32.totalorder %s15, 3
      %p117 = pnand %p115, %p116
      %p118 = pneg %p117
      // Predicated region
      $region9: #{tpu_custom_call.1} parent=5 // pred_check
        _
      $region10: #{tpu_custom_call.1} parent=5 // pred_check_branch
        %120 = sbr.rel (%p117) target = $region12
      $region11: #{tpu_custom_call.1} parent=5 // pred_region
        %s121 = ssub.s32 %s15, 1
        // Predicated region
        $region13: #{tpu_custom_call.1} parent=11 // pred_check
          %p122 = pneg %p53
        $region14: #{tpu_custom_call.1} parent=11 // pred_check_branch
          %124 = sbr.rel (%p122) target = $region16
        $region15: #{tpu_custom_call.1} parent=11 // pred_region
          %s125 = smul.u32 16, %s25
          %s127 = ssub.s32 1024, 1024
          %128 = vsyncadd [#allocation3], %s127
          %s129 = smul.addr %s125, 64
          %s130 = scalar_lea.hbm %s0, %s129
          %s131 = sshll.u32 [#allocation2], 4
          %s132 = int_to_ptr.vmem [resolvable:$true] %s131
          %137 = dma.hbm_to_vmem [thread:$0]  %s130, 1024, %s132, [#allocation3], 64, 64, 4
        $region16: #{tpu_custom_call.1} parent=11 // pred_fallthru
          _
      $region12: #{tpu_custom_call.1} parent=5 // pred_fallthru
        _
      %p138 = scmp.lt.s32.totalorder %s15, 2
      // Predicated region
      $region17: #{tpu_custom_call.1} parent=5 // pred_check
        %p139 = pneg %p138
      $region18: #{tpu_custom_call.1} parent=5 // pred_check_branch
        %141 = sbr.rel (%p139) target = $region20
      $region19: #{tpu_custom_call.1} parent=5 // pred_region
        // Predicated region
        $region21: #{tpu_custom_call.1} parent=19 // pred_check
          %p142 = pneg %p73
        $region22: #{tpu_custom_call.1} parent=19 // pred_check_branch
          %144 = sbr.rel (%p142) target = $region24
        $region23: #{tpu_custom_call.1} parent=19 // pred_region
          %s145 = sand.u32 %s63, 1
          %s146 = scalar_lea.sflag [#allocation6], %s145
          %s147 = sand.u32 %s63, 1
          %s148 = smul.addr %s147, 64
          %s149 = scalar_lea.vmem [#allocation5], %s148
          %s151 = ssub.s32 1024, 1024
          %152 = vsyncadd %s146, %s151
          %s153 = smul.addr %s22, 16
          %s154 = smul.addr %s153, 64
          %s155 = scalar_lea.hbm %s1, %s154
          %s156 = sshll.u32 %s149, 4
          %s157 = int_to_ptr.vmem [resolvable:$true] %s156
          %162 = dma.hbm_to_vmem [thread:$0]  %s155, 1024, %s157, %s146, 64, 64, 4
        $region24: #{tpu_custom_call.1} parent=19 // pred_fallthru
          _
      $region20: #{tpu_custom_call.1} parent=5 // pred_fallthru
        _
      %p163 = scmp.le.s32.totalorder 1, %s15
      %p164 = scmp.lt.s32.totalorder %s15, 3
      %p165 = pnand %p163, %p164
      %p166 = pneg %p165
      // Predicated region
      $region25: #{tpu_custom_call.1} parent=5 // pred_check
        _
      $region26: #{tpu_custom_call.1} parent=5 // pred_check_branch
        %168 = sbr.rel (%p165) target = $region28
      $region27: #{tpu_custom_call.1} parent=5 // pred_region
        %s169 = ssub.s32 %s15, 1
        // Predicated region
        $region29: #{tpu_custom_call.1} parent=27 // pred_check
          %p170 = pneg %p53
        $region30: #{tpu_custom_call.1} parent=27 // pred_check_branch
          %172 = sbr.rel (%p170) target = $region32
        $region31: #{tpu_custom_call.1} parent=27 // pred_region
          %173 = dma.done [#allocation3], 1024
        $region32: #{tpu_custom_call.1} parent=27 // pred_fallthru
          _
        %s174 = sand.u32 %s66, 1
        %s175 = scalar_lea.sflag [#allocation6], %s174
        %s176 = sand.u32 %s66, 1
        %s177 = smul.addr %s176, 64
        %s178 = scalar_lea.vmem [#allocation5], %s177
        // Predicated region
        $region33: #{tpu_custom_call.1} parent=27 // pred_check
          %p179 = pneg %p79
        $region34: #{tpu_custom_call.1} parent=27 // pred_check_branch
          %181 = sbr.rel (%p179) target = $region36
        $region35: #{tpu_custom_call.1} parent=27 // pred_region
          %182 = dma.done %s175, 1024
        $region36: #{tpu_custom_call.1} parent=27 // pred_fallthru
          _
        %p183 = pneg %p53
        %p184 = pneg %p50
        %s185 = sand.u32 %s66, 1
        %s186 = scalar_lea.sflag [#allocation6], %s185
        %s187 = sand.u32 %s66, 1
        %s188 = smul.addr %s187, 64
        %s189 = scalar_lea.vmem [#allocation5], %s188
        %p190 = pneg %p79
        %p191 = pneg %p76
        %p192 = pneg %p107
        %p193 = pneg %p104
        %s194 = sand.u32 %s94, 1
        %s195 = scalar_lea.sflag [#allocation4], %s194
        %s196 = sand.u32 %s94, 1
        %s197 = smul.addr %s196, 64
        %s198 = scalar_lea.vmem [#allocation7], %s197
        %s199 = smul.u32 16, %s25
        %s200 = smul.u32 16, %s25
        %v202 = vld [vmem:[#allocation2] sm:$0xf]
        %v203 = vld [vmem:[#allocation2 + $0x4] sm:$0xf]
        %v204 = vld [vmem:[#allocation2 + $0x8] sm:$0xf]
        %v205 = vld [vmem:[#allocation2 + $0xc] sm:$0xf]
        %v206 = vld [vmem:[#allocation2 + $0x10] sm:$0xf]
        %v207 = vld [vmem:[#allocation2 + $0x14] sm:$0xf]
        %v208 = vld [vmem:[#allocation2 + $0x18] sm:$0xf]
        %v209 = vld [vmem:[#allocation2 + $0x1c] sm:$0xf]
        %v210 = vld [vmem:[#allocation2 + $0x20] sm:$0xf]
        %v211 = vld [vmem:[#allocation2 + $0x24] sm:$0xf]
        %v212 = vld [vmem:[#allocation2 + $0x28] sm:$0xf]
        %v213 = vld [vmem:[#allocation2 + $0x2c] sm:$0xf]
        %v214 = vld [vmem:[#allocation2 + $0x30] sm:$0xf]
        %v215 = vld [vmem:[#allocation2 + $0x34] sm:$0xf]
        %v216 = vld [vmem:[#allocation2 + $0x38] sm:$0xf]
        %v217 = vld [vmem:[#allocation2 + $0x3c] sm:$0xf]
        %v218 = vld [vmem:[%s178] sm:$0xf]
        %v219 = vld [vmem:[%s178 + $0x4] sm:$0xf]
        %v220 = vld [vmem:[%s178 + $0x8] sm:$0xf]
        %v221 = vld [vmem:[%s178 + $0xc] sm:$0xf]
        %v222 = vld [vmem:[%s178 + $0x10] sm:$0xf]
        %v223 = vld [vmem:[%s178 + $0x14] sm:$0xf]
        %v224 = vld [vmem:[%s178 + $0x18] sm:$0xf]
        %v225 = vld [vmem:[%s178 + $0x1c] sm:$0xf]
        %v226 = vld [vmem:[%s178 + $0x20] sm:$0xf]
        %v227 = vld [vmem:[%s178 + $0x24] sm:$0xf]
        %v228 = vld [vmem:[%s178 + $0x28] sm:$0xf]
        %v229 = vld [vmem:[%s178 + $0x2c] sm:$0xf]
        %v230 = vld [vmem:[%s178 + $0x30] sm:$0xf]
        %v231 = vld [vmem:[%s178 + $0x34] sm:$0xf]
        %v232 = vld [vmem:[%s178 + $0x38] sm:$0xf]
        %v233 = vld [vmem:[%s178 + $0x3c] sm:$0xf]
        %v250 = vunpack.c.l.b16 %v202
        %v251 = vunpack.c.l.b16 %v203
        %v252 = vunpack.c.l.b16 %v204
        %v253 = vunpack.c.l.b16 %v205
        %v254 = vunpack.c.l.b16 %v206
        %v255 = vunpack.c.l.b16 %v207
        %v256 = vunpack.c.l.b16 %v208
        %v257 = vunpack.c.l.b16 %v209
        %v258 = vunpack.c.l.b16 %v210
        %v259 = vunpack.c.l.b16 %v211
        %v260 = vunpack.c.l.b16 %v212
        %v261 = vunpack.c.l.b16 %v213
        %v262 = vunpack.c.l.b16 %v214
        %v263 = vunpack.c.l.b16 %v215
        %v264 = vunpack.c.l.b16 %v216
        %v265 = vunpack.c.l.b16 %v217
        %v266 = vpack.c.b16 %v251, %v250
        %v267 = vpack.c.b16 %v253, %v252
        %v268 = vpack.c.b16 %v255, %v254
        %v269 = vpack.c.b16 %v257, %v256
        %v270 = vpack.c.b16 %v259, %v258
        %v271 = vpack.c.b16 %v261, %v260
        %v272 = vpack.c.b16 %v263, %v262
        %v273 = vpack.c.b16 %v265, %v264
        %v298 = vunpack.c.l.b16 %v218
        %v299 = vunpack.c.l.b16 %v219
        %v300 = vunpack.c.l.b16 %v220
        %v301 = vunpack.c.l.b16 %v221
        %v302 = vunpack.c.l.b16 %v222
        %v303 = vunpack.c.l.b16 %v223
        %v304 = vunpack.c.l.b16 %v224
        %v305 = vunpack.c.l.b16 %v225
        %v306 = vunpack.c.l.b16 %v226
        %v307 = vunpack.c.l.b16 %v227
        %v308 = vunpack.c.l.b16 %v228
        %v309 = vunpack.c.l.b16 %v229
        %v310 = vunpack.c.l.b16 %v230
        %v311 = vunpack.c.l.b16 %v231
        %v312 = vunpack.c.l.b16 %v232
        %v313 = vunpack.c.l.b16 %v233
        %v314 = vpack.c.b16 %v299, %v298
        %v315 = vpack.c.b16 %v301, %v300
        %v316 = vpack.c.b16 %v303, %v302
        %v317 = vpack.c.b16 %v305, %v304
        %v318 = vpack.c.b16 %v307, %v306
        %v319 = vpack.c.b16 %v309, %v308
        %v320 = vpack.c.b16 %v311, %v310
        %v321 = vpack.c.b16 %v313, %v312
        %330 = vmatprep.subr.bf16.mxu0 0
        %331 = vmatpush1.bf16.msra.mxu0 %v314
        %332 = vmatprep.subr.bf16.mxu0 0
        %333 = vmatpush1.bf16.msra.mxu0 %v315
        %334 = vmatprep.subr.bf16.mxu0 0
        %335 = vmatpush1.bf16.msra.mxu0 %v316
        %336 = vmatprep.subr.bf16.mxu0 0
        %337 = vmatpush1.bf16.msra.mxu0 %v317
        %338 = vmatprep.subr.bf16.mxu0 0
        %339 = vmatpush1.bf16.msra.mxu0 %v318
        %340 = vmatprep.subr.bf16.mxu0 0
        %341 = vmatpush1.bf16.msra.mxu0 %v319
        %342 = vmatprep.subr.bf16.mxu0 0
        %343 = vmatpush1.bf16.msra.mxu0 %v320
        %344 = vmatprep.subr.bf16.mxu0 0
        %345 = vmatpush1.bf16.msra.mxu0 %v321
        %346 = vmatprep.subr.bf16.mxu0 0
        %347 = vmatpush1.bf16.msra.mxu0 0
        %348 = vmatprep.subr.bf16.mxu0 0
        %349 = vmatpush1.bf16.msra.mxu0 0
        %350 = vmatprep.subr.bf16.mxu0 0
        %351 = vmatpush1.bf16.msra.mxu0 0
        %352 = vmatprep.subr.bf16.mxu0 0
        %353 = vmatpush1.bf16.msra.mxu0 0
        %354 = vmatprep.subr.bf16.mxu0 0
        %355 = vmatpush1.bf16.msra.mxu0 0
        %356 = vmatprep.subr.bf16.mxu0 0
        %357 = vmatpush1.bf16.msra.mxu0 0
        %358 = vmatprep.subr.bf16.mxu0 0
        %359 = vmatpush1.bf16.msra.mxu0 0
        %360 = vmatprep.subr.bf16.mxu0 0
        %361 = vmatpush1.bf16.msra.mxu0 0
        %362 = vmatprep.mubr.bf16.mxu0 0
        %363 = vmatmul.mubr.bf16.gmra.mrb[0].mxu0 %v266
        %v364 = vpop.f32.mrb[0].mxu0
        %v365 = vadd.f32 0.0, %v364
        %v366 = vpop.f32.mrb[0].mxu0
        %v367 = vpop.f32.mrb[0].mxu0
        %v368 = vadd.f32 0.0, %v367
        %v369 = vpop.f32.mrb[0].mxu0
        %370 = vmatprep.mubr.bf16.mxu0 0
        %371 = vmatmul.mubr.bf16.gmra.mrb[0].mxu0 %v267
        %v372 = vpop.f32.mrb[0].mxu0
        %v373 = vadd.f32 0.0, %v372
        %v374 = vpop.f32.mrb[0].mxu0
        %v375 = vpop.f32.mrb[0].mxu0
        %v376 = vadd.f32 0.0, %v375
        %v377 = vpop.f32.mrb[0].mxu0
        %378 = vmatprep.mubr.bf16.mxu0 0
        %379 = vmatmul.mubr.bf16.gmra.mrb[0].mxu0 %v268
        %v380 = vpop.f32.mrb[0].mxu0
        %v381 = vadd.f32 0.0, %v380
        %v382 = vpop.f32.mrb[0].mxu0
        %v383 = vpop.f32.mrb[0].mxu0
        %v384 = vadd.f32 0.0, %v383
        %v385 = vpop.f32.mrb[0].mxu0
        %386 = vmatprep.mubr.bf16.mxu0 0
        %387 = vmatmul.mubr.bf16.gmra.mrb[0].mxu0 %v269
        %v388 = vpop.f32.mrb[0].mxu0
        %v389 = vadd.f32 0.0, %v388
        %v390 = vpop.f32.mrb[0].mxu0
        %v391 = vpop.f32.mrb[0].mxu0
        %v392 = vadd.f32 0.0, %v391
        %v393 = vpop.f32.mrb[0].mxu0
        %394 = vmatprep.mubr.bf16.mxu0 0
        %395 = vmatmul.mubr.bf16.gmra.mrb[0].mxu0 %v270
        %v396 = vpop.f32.mrb[0].mxu0
        %v397 = vadd.f32 0.0, %v396
        %v398 = vpop.f32.mrb[0].mxu0
        %v399 = vpop.f32.mrb[0].mxu0
        %v400 = vadd.f32 0.0, %v399
        %v401 = vpop.f32.mrb[0].mxu0
        %402 = vmatprep.mubr.bf16.mxu0 0
        %403 = vmatmul.mubr.bf16.gmra.mrb[0].mxu0 %v271
        %v404 = vpop.f32.mrb[0].mxu0
        %v405 = vadd.f32 0.0, %v404
        %v406 = vpop.f32.mrb[0].mxu0
        %v407 = vpop.f32.mrb[0].mxu0
        %v408 = vadd.f32 0.0, %v407
        %v409 = vpop.f32.mrb[0].mxu0
        %410 = vmatprep.mubr.bf16.mxu0 0
        %411 = vmatmul.mubr.bf16.gmra.mrb[0].mxu0 %v272
        %v412 = vpop.f32.mrb[0].mxu0
        %v413 = vadd.f32 0.0, %v412
        %v414 = vpop.f32.mrb[0].mxu0
        %v415 = vpop.f32.mrb[0].mxu0
        %v416 = vadd.f32 0.0, %v415
        %v417 = vpop.f32.mrb[0].mxu0
        %418 = vmatprep.mubr.bf16.mxu0 0
        %419 = vmatmul.mubr.bf16.gmra.mrb[0].mxu0 %v273
        %v420 = vpop.f32.mrb[0].mxu0
        %v421 = vadd.f32 0.0, %v420
        %v422 = vpop.f32.mrb[0].mxu0
        %v423 = vpop.f32.mrb[0].mxu0
        %v424 = vadd.f32 0.0, %v423
        %v425 = vpop.f32.mrb[0].mxu0
        %426 = vdwg.mxu0
        %v427 = vpack.c.bf16 %v368, %v365
        %v428 = vpack.c.bf16 %v376, %v373
        %v429 = vpack.c.bf16 %v384, %v381
        %v430 = vpack.c.bf16 %v392, %v389
        %v431 = vpack.c.bf16 %v400, %v397
        %v432 = vpack.c.bf16 %v408, %v405
        %v433 = vpack.c.bf16 %v416, %v413
        %v434 = vpack.c.bf16 %v424, %v421
        %v443 = vunpack.c.l.b16 %v427
        %v444 = vunpack.c.h.b16 %v427
        %v445 = vunpack.c.l.b16 %v428
        %v446 = vunpack.c.h.b16 %v428
        %v447 = vunpack.c.l.b16 %v429
        %v448 = vunpack.c.h.b16 %v429
        %v449 = vunpack.c.l.b16 %v430
        %v450 = vunpack.c.h.b16 %v430
        %v451 = vunpack.c.l.b16 %v431
        %v452 = vunpack.c.h.b16 %v431
        %v453 = vunpack.c.l.b16 %v432
        %v454 = vunpack.c.h.b16 %v432
        %v455 = vunpack.c.l.b16 %v433
        %v456 = vunpack.c.h.b16 %v433
        %v457 = vunpack.c.l.b16 %v434
        %v458 = vunpack.c.h.b16 %v434
        %v459 = vpack.c.b16 %v443, %v443
        %v460 = vpack.c.b16 %v444, %v444
        %v461 = vpack.c.b16 %v445, %v445
        %v462 = vpack.c.b16 %v446, %v446
        %v463 = vpack.c.b16 %v447, %v447
        %v464 = vpack.c.b16 %v448, %v448
        %v465 = vpack.c.b16 %v449, %v449
        %v466 = vpack.c.b16 %v450, %v450
        %v467 = vpack.c.b16 %v451, %v451
        %v468 = vpack.c.b16 %v452, %v452
        %v469 = vpack.c.b16 %v453, %v453
        %v470 = vpack.c.b16 %v454, %v454
        %v471 = vpack.c.b16 %v455, %v455
        %v472 = vpack.c.b16 %v456, %v456
        %v473 = vpack.c.b16 %v457, %v457
        %v474 = vpack.c.b16 %v458, %v458
        %491 = vst [vmem:[%s198] sm:$0xf] %v459
        %492 = vst [vmem:[%s198 + $0x4] sm:$0xf] %v460
        %493 = vst [vmem:[%s198 + $0x8] sm:$0xf] %v461
        %494 = vst [vmem:[%s198 + $0xc] sm:$0xf] %v462
        %495 = vst [vmem:[%s198 + $0x10] sm:$0xf] %v463
        %496 = vst [vmem:[%s198 + $0x14] sm:$0xf] %v464
        %497 = vst [vmem:[%s198 + $0x18] sm:$0xf] %v465
        %498 = vst [vmem:[%s198 + $0x1c] sm:$0xf] %v466
        %499 = vst [vmem:[%s198 + $0x20] sm:$0xf] %v467
        %500 = vst [vmem:[%s198 + $0x24] sm:$0xf] %v468
        %501 = vst [vmem:[%s198 + $0x28] sm:$0xf] %v469
        %502 = vst [vmem:[%s198 + $0x2c] sm:$0xf] %v470
        %503 = vst [vmem:[%s198 + $0x30] sm:$0xf] %v471
        %504 = vst [vmem:[%s198 + $0x34] sm:$0xf] %v472
        %505 = vst [vmem:[%s198 + $0x38] sm:$0xf] %v473
        %506 = vst [vmem:[%s198 + $0x3c] sm:$0xf] %v474
        %s507 = sand.u32 %s94, 1
        %s508 = scalar_lea.sflag [#allocation4], %s507
        %s509 = sand.u32 %s94, 1
        %s510 = smul.addr %s509, 64
        %s511 = scalar_lea.vmem [#allocation7], %s510
        // Predicated region
        $region37: #{tpu_custom_call.1} parent=27 // pred_check
          %p512 = pneg %p104
        $region38: #{tpu_custom_call.1} parent=27 // pred_check_branch
          %514 = sbr.rel (%p512) target = $region40
        $region39: #{tpu_custom_call.1} parent=27 // pred_region
          %s515 = smul.u32 16, %s25
          %s517 = ssub.s32 1024, 1024
          %518 = vsyncadd %s508, %s517
          %s519 = smul.addr %s24, 16
          %s520 = sadd.s32 %s515, %s519
          %s521 = smul.addr %s520, 64
          %s522 = scalar_lea.hbm %s2, %s521
          %s523 = sshll.u32 %s511, 4
          %s524 = int_to_ptr.vmem [resolvable:$true] %s523
          %529 = dma.vmem_to_hbm [thread:$0]  %s524, 1024, %s522, %s508, 64, 64, 4
        $region40: #{tpu_custom_call.1} parent=27 // pred_fallthru
          _
      $region28: #{tpu_custom_call.1} parent=5 // pred_fallthru
        _
      %p530 = scmp.le.s32.totalorder 2, %s15
      // Predicated region
      $region41: #{tpu_custom_call.1} parent=5 // pred_check
        %p531 = pneg %p530
      $region42: #{tpu_custom_call.1} parent=5 // pred_check_branch
        %533 = sbr.rel (%p531) target = $region44
      $region43: #{tpu_custom_call.1} parent=5 // pred_region
        %s534 = ssub.s32 %s15, 2
        // Predicated region
        $region45: #{tpu_custom_call.1} parent=43 // pred_check
          %p535 = pneg %p110
        $region46: #{tpu_custom_call.1} parent=43 // pred_check_branch
          %537 = sbr.rel (%p535) target = $region48
        $region47: #{tpu_custom_call.1} parent=43 // pred_region
          %s538 = sand.u32 %s95, 1
          %s539 = scalar_lea.sflag [#allocation4], %s538
          %s540 = sand.u32 %s95, 1
          %s541 = smul.addr %s540, 64
          %s542 = scalar_lea.vmem [#allocation7], %s541
          %543 = dma.done %s539, 1024
        $region48: #{tpu_custom_call.1} parent=43 // pred_fallthru
          _
      $region44: #{tpu_custom_call.1} parent=5 // pred_fallthru
        _
    $region6: #{tpu_custom_call.1} parent=1 // loop_footer
      %s19 = sadd.s32 1, %s15
    $region7: #{tpu_custom_call.1} parent=1 // loop_footer_branch
      %14 = sbr.rel target = $region3
    $region8: #{tpu_custom_call.1} parent=1 // loop_exit
      _
    %544 = vsyncpa [#allocation3], 1
    %s545 = scalar_lea.sflag [#allocation3], 1
    %546 = vsyncpa %s545, 1
    %547 = vsyncpa [#allocation6], 1
    %s548 = scalar_lea.sflag [#allocation6], 1
    %549 = vsyncpa %s548, 1
    %550 = vsyncpa [#allocation4], 1
    %s551 = scalar_lea.sflag [#allocation4], 1
    %552 = vsyncpa %s551, 1

</llo_original>
